<compile_context>
chip_gen: v6e
topology: v6e:2x2x1
jax: 0.10.0
libtpu: 0.0.40
codegen_flags: <defaults>
</compile_context>

<pallas_src>
import jax
import jax.numpy as jnp
import numpy as np
from jax.experimental import pallas as pl
from jax.experimental.pallas import tpu as pltpu

LRELU_SLOPE = 0.1
_VMEM_BUDGET = 12 * 1024 * 1024  # per-call streaming-buffer budget (bytes)


def get_padding(kernel_size, dilation=1):
    return int((kernel_size * dilation - dilation) / 2)


# --------------------------------------------------------------------------
# Pallas kernel: L-tiled dilated Conv1d with fused scale/leaky-relu/bias/adds/tanh
# --------------------------------------------------------------------------
def _pick_tl(cin, cout, n_add, hb, l_out):
    """Pick the output tile length (multiple of 128 and of the halo block)."""
    ab = 2  # bf16 activation bytes
    per_col = (2 * cin * ab            # x tile, double-buffered
               + 2 * cout * ab         # out tile, double-buffered
               + 2 * n_add * cout * ab  # additive inputs, double-buffered
               + cin * ab              # halo-assembled VMEM scratch
               + 2 * cout * 4)         # f32 accumulator temporaries
    tl = _VMEM_BUDGET // per_col
    tl = max(hb, min(16384, tl))
    tl = (tl // hb) * hb
    cap = -(-l_out // hb) * hb          # no point tiling past the array
    tl = max(hb, min(tl, cap))
    return int(tl)


def _make_conv_kernel(K, dilation, TL, pre_scale, pre_slope, n_add, act):
    def prep(v):
        v = v.astype(jnp.float32)
        if pre_scale is not None:
            v = v * pre_scale
        if pre_slope is not None:
            v = jnp.where(v >= 0, v, pre_slope * v)
        return v.astype(jnp.bfloat16)

    def kernel(*refs):
        xa_ref, xb_ref, w_ref, b_ref = refs[:4]
        add_refs = refs[4:4 + n_add]
        o_ref = refs[4 + n_add]
        xbuf = refs[5 + n_add]                      # VMEM scratch (Cin, TL + HB)

        # Assemble the halo'd input tile (pre-activation fused; leaky(0)=0 keeps
        # zero padding exact).
        xbuf[:, :TL] = prep(xa_ref[0])
        xbuf[:, TL:] = prep(xb_ref[0])

        acc = jnp.zeros(o_ref.shape[1:], jnp.float32)        # (Cout, TL)
        for k in range(K):                                   # static unroll
            off = k * dilation
            acc = acc + jnp.dot(w_ref[k], xbuf[:, off:off + TL],
                                preferred_element_type=jnp.float32)
        acc = acc + b_ref[...]                               # (Cout, 1) broadcast
        for a_ref in add_refs:
            acc = acc + a_ref[0].astype(jnp.float32)
        if act == "tanh":
            acc = jnp.tanh(acc)
        o_ref[0] = acc.astype(o_ref.dtype)

    return kernel


def conv1d_pallas(x, w, b, *, dilation=1, pad_left=0, pad_right=0,
                  pre_scale=None, pre_slope=None, adds=(), act="none",
                  out_dtype=jnp.bfloat16):
    """x: (B, Cin, L) bf16, w: (K, Cout, Cin) bf16, b: (Cout,) f32.

    Returns (B, Cout, L_out) with L_out = L + pad_left + pad_right - dilation*(K-1).
    Computes out[j] = act(sum_k w[k] @ prep(xpad)[:, j + k*dilation] + b + adds[j]).
    """
    B, Cin, L = x.shape
    K, Cout, Cin_w = w.shape
    assert Cin_w == Cin
    halo = dilation * (K - 1)
    L_out = L + pad_left + pad_right - halo
    assert L_out > 0
    adds = tuple(adds)

    HB = ((max(halo, 1) + 127) // 128) * 128     # halo block width (lane multiple)
    TL = _pick_tl(Cin, Cout, len(adds), HB, L_out)
    assert TL % HB == 0 and TL % 128 == 0
    nT = -(-L_out // TL)
    Lp = nT * TL + HB                             # padded input length
    xp = jnp.pad(x, ((0, 0), (0, 0), (pad_left, Lp - L - pad_left)))
    b2 = b.astype(jnp.float32).reshape(Cout, 1)

    kernel = _make_conv_kernel(K, dilation, TL, pre_scale, pre_slope, len(adds), act)
    hbr = TL // HB

    in_specs = [
        pl.BlockSpec((1, Cin, TL), lambda bi, ti: (bi, 0, ti)),            # main tile
        pl.BlockSpec((1, Cin, HB), lambda bi, ti: (bi, 0, (ti + 1) * hbr)),  # halo
        pl.BlockSpec((K, Cout, Cin), lambda bi, ti: (0, 0, 0)),            # resident W
        pl.BlockSpec((Cout, 1), lambda bi, ti: (0, 0)),                    # resident b
    ]
    inputs = [xp, xp, w, b2]
    for a in adds:
        in_specs.append(pl.BlockSpec((1, Cout, TL), lambda bi, ti: (bi, 0, ti)))
        inputs.append(a)

    return pl.pallas_call(
        kernel,
        out_shape=jax.ShapeDtypeStruct((B, Cout, L_out), out_dtype),
        grid=(B, nT),
        in_specs=in_specs,
        out_specs=pl.BlockSpec((1, Cout, TL), lambda bi, ti: (bi, 0, ti)),
        scratch_shapes=[pltpu.VMEM((Cin, TL + HB), jnp.bfloat16)],
        compiler_params=pltpu.CompilerParams(
            dimension_semantics=("parallel", "parallel"),
            vmem_limit_bytes=64 * 1024 * 1024),
    )(*inputs)


# --------------------------------------------------------------------------
# ConvTranspose1d via polyphase decomposition (no zero-insertion)
# --------------------------------------------------------------------------
def conv_transpose1d_polyphase(x, w_cio, b, *, stride, padding,
                               pre_scale=None, pre_slope=None,
                               out_dtype=jnp.bfloat16):
    """PyTorch ConvTranspose1d. x: (B, Cin, L) bf16, w: (Cin, Cout, K) torch layout."""
    Cin, Cout, K = w_cio.shape
    B, Cin_x, L = x.shape
    assert Cin_x == Cin
    s, p = stride, padding
    L_out = (L - 1) * s - 2 * p + K
    assert L_out >= s

    # out[s*q + r] = sum_m W[:, :, s*m + p + r]^T @ x[q - m]   (x out of range -> 0)
    phase_outs = []
    for r in range(s):
        m_lo = -((p + r) // s)                 # ceil(-(p+r)/s)
        m_hi = (K - 1 - p - r) // s            # floor((K-1-p-r)/s)
        Qr = -(-(L_out - r) // s)              # outputs with j = s*q + r < L_out
        if m_hi < m_lo:                        # no taps -> bias only
            ph = jnp.broadcast_to(b.astype(jnp.float32)[None, :, None],
                                  (B, Cout, Qr)).astype(out_dtype)
            phase_outs.append(ph)
            continue
        taps = [s * m + p + r for m in range(m_hi, m_lo - 1, -1)]
        w_ph = jnp.stack([w_cio[:, :, kk] for kk in taps], axis=0)   # (Mr, Cin, Cout)
        w_ph = jnp.transpose(w_ph, (0, 2, 1))                        # (Mr, Cout, Cin)
        Mr = len(taps)

        x_r, L_r = x, L
        pad_l = m_hi
        if pad_l < 0:
            x_r = x_r[:, :, -pad_l:]
            L_r += pad_l
            pad_l = 0
        pad_r = Qr + (Mr - 1) - L_r - pad_l
        if pad_r < 0:
            x_r = x_r[:, :, :L_r + pad_r]
            L_r += pad_r
            pad_r = 0
        ph = conv1d_pallas(x_r, w_ph, b, dilation=1, pad_left=pad_l,
                           pad_right=pad_r, pre_scale=pre_scale,
                           pre_slope=pre_slope, out_dtype=out_dtype)
        phase_outs.append(ph)

    Qmax = max(ph.shape[-1] for ph in phase_outs)
    phase_outs = [jnp.pad(ph, ((0, 0), (0, 0), (0, Qmax - ph.shape[-1])))
                  for ph in phase_outs]
    y = jnp.stack(phase_outs, axis=-1)            # (B, Cout, Qmax, s)
    return y.reshape(B, Cout, Qmax * s)[:, :, :L_out]


# --------------------------------------------------------------------------
# HiFi-GAN generator (forward only); weights are effective (weight_norm merged)
# --------------------------------------------------------------------------
def init_params(key, cfg):
    std = 0.1

    def normal(key, shape):
        return (std * jax.random.normal(key, shape, jnp.float32)).astype(jnp.bfloat16)

    def normal_f32(key, shape):
        return std * jax.random.normal(key, shape, jnp.float32)

    keys = iter(jax.random.split(key, 512))
    upc = cfg["upsample_initial_channel"]
    params = {}
    params["conv_pre"] = {
        "w": normal(next(keys), (cfg["initial_kernel"], upc, cfg["input_channels"])),
        "b": normal_f32(next(keys), (upc,)),
    }
    params["ups"] = []
    for i, (u, k) in enumerate(zip(cfg["upsample_rates"], cfg["upsample_kernel_sizes"])):
        cin = upc // 2 ** i
        cout = max(upc // 2 ** (i + 1), 1)
        params["ups"].append({
            "w": normal(next(keys), (cin, cout, k)),   # torch ConvTranspose1d layout
            "b": normal_f32(next(keys), (cout,)),
        })
    params["resblocks"] = []
    ch = upc
    for i in range(len(cfg["upsample_rates"])):
        ch = upc // 2 ** (i + 1)
        for k, dil in zip(cfg["resblock_kernel_sizes"], cfg["resblock_dilation_sizes"]):
            if cfg["resblock"] == 1:
                convs1 = [{"w": normal(next(keys), (k, ch, ch)),
                           "b": normal_f32(next(keys), (ch,)),
                           "dilation": d, "padding": get_padding(k, d)} for d in dil]
                convs2 = [{"w": normal(next(keys), (k, ch, ch)),
                           "b": normal_f32(next(keys), (ch,)),
                           "dilation": 1, "padding": get_padding(k, 1)} for _ in dil]
                params["resblocks"].append({"type": 1, "convs1": convs1, "convs2": convs2})
            else:
                convs = [{"w": normal(next(keys), (k, ch, ch)),
                          "b": normal_f32(next(keys), (ch,)),
                          "dilation": d, "padding": get_padding(k, d)} for d in dil]
                params["resblocks"].append({"type": 2, "convs": convs})
    params["conv_post"] = {
        "w": normal(next(keys), (cfg["final_kernel"], 1, ch)),
        "b": normal_f32(next(keys), (1,)),
    }
    return params


def _resblock_forward(x, rb, extra, conv_fn):
    """Resblock output; the running xs (`extra`) is fused into the last conv."""
    if rb["type"] == 2:
        convs = rb["convs"]
        n = len(convs)
        for idx, c in enumerate(convs):
            adds = [x]
            if extra is not None and idx == n - 1:
                adds.append(extra)
            x = conv_fn(x, c["w"], c["b"], dilation=c["dilation"],
                        pad_left=c["padding"], pad_right=c["padding"],
                        pre_slope=LRELU_SLOPE, adds=tuple(adds))
        return x
    else:  # ResBlock1
        pairs = list(zip(rb["convs1"], rb["convs2"]))
        n = len(pairs)
        for idx, (c1, c2) in enumerate(pairs):
            xt = conv_fn(x, c1["w"], c1["b"], dilation=c1["dilation"],
                         pad_left=c1["padding"], pad_right=c1["padding"],
                         pre_slope=LRELU_SLOPE)
            adds = [x]
            if extra is not None and idx == n - 1:
                adds.append(extra)
            x = conv_fn(xt, c2["w"], c2["b"], dilation=c2["dilation"],
                        pad_left=c2["padding"], pad_right=c2["padding"],
                        pre_slope=LRELU_SLOPE, adds=tuple(adds))
        return x


def _generator_forward(params, cfg, x, conv_fn, convt_fn):
    nk = len(cfg["resblock_kernel_sizes"])
    x = x.astype(jnp.bfloat16)
    cp = params["conv_pre"]
    x = conv_fn(x, cp["w"], cp["b"], dilation=1, pad_left=3, pad_right=3)
    scale = None  # carries the /num_kernels of the previous level (fused pre-scale)
    for i, (u, k) in enumerate(zip(cfg["upsample_rates"], cfg["upsample_kernel_sizes"])):
        up = params["ups"][i]
        x = convt_fn(x, up["w"], up["b"], stride=u, padding=(k - u) // 2,
                     pre_scale=scale, pre_slope=LRELU_SLOPE)
        xs = None
        for j in range(nk):
            xs = _resblock_forward(x, params["resblocks"][i * nk + j],
                                   extra=xs, conv_fn=conv_fn)
        x = xs
        scale = 1.0 / nk
    post = params["conv_post"]
    # final: leaky(x/nk, 0.01) -> conv_post -> tanh, all fused into one kernel
    return conv_fn(x, post["w"], post["b"], dilation=1, pad_left=3, pad_right=3,
                   pre_scale=scale, pre_slope=0.01, act="tanh",
                   out_dtype=jnp.float32)


def hifi_forward(params, cfg, x):
    return _generator_forward(params, cfg, x, conv1d_pallas,
                              conv_transpose1d_polyphase)


# --------------------------------------------------------------------------
# Pure-JAX (XLA conv) reference with identical bf16 rounding points
# --------------------------------------------------------------------------
def _ref_prep(x, pre_scale, pre_slope):
    v = x.astype(jnp.float32)
    if pre_scale is not None:
        v = v * pre_scale
    if pre_slope is not None:
        v = jnp.where(v >= 0, v, pre_slope * v)
    return v.astype(jnp.bfloat16).astype(jnp.float32)


def _ref_conv1d(x, w_kco, b, *, dilation=1, pad_left=0, pad_right=0,
                pre_scale=None, pre_slope=None, adds=(), act="none",
                out_dtype=jnp.bfloat16):
    v = _ref_prep(x, pre_scale, pre_slope)
    w_oik = jnp.transpose(w_kco.astype(jnp.float32), (1, 2, 0))   # (Cout, Cin, K)
    y = jax.lax.conv_general_dilated(
        v, w_oik, (1,), [(pad_left, pad_right)], rhs_dilation=(dilation,),
        dimension_numbers=("NCH", "OIH", "NCH"))
    y = y + b.astype(jnp.float32)[None, :, None]
    for a in adds:
        y = y + a.astype(jnp.float32)
    if act == "tanh":
        y = jnp.tanh(y)
    return y.astype(out_dtype)


def _ref_conv_transpose1d(x, w_cio, b, *, stride, padding, pre_scale=None,
                          pre_slope=None, out_dtype=jnp.bfloat16):
    v = _ref_prep(x, pre_scale, pre_slope)
    K = w_cio.shape[-1]
    w_oik = jnp.transpose(jnp.flip(w_cio.astype(jnp.float32), axis=-1), (1, 0, 2))
    y = jax.lax.conv_general_dilated(
        v, w_oik, (1,), [(K - 1 - padding, K - 1 - padding)],
        lhs_dilation=(stride,), dimension_numbers=("NCH", "OIH", "NCH"))
    y = y + b.astype(jnp.float32)[None, :, None]
    return y.astype(out_dtype)


def ref_forward(params, cfg, x):
    return _generator_forward(params, cfg, x, _ref_conv1d, _ref_conv_transpose1d)


if __name__ == "__main__":
    # small config consistent with the module's structure (resblock=2 default)
    cfg = {
        "upsample_rates": [2, 2],
        "upsample_kernel_sizes": [4, 4],
        "resblock_kernel_sizes": [3, 5],
        "resblock_dilation_sizes": [[1, 2], [2, 6]],
        "resblock": 2,
        "input_channels": 16,
        "initial_kernel": 7,
        "final_kernel": 7,
        "upsample_initial_channel": 32,
    }

    key = jax.random.PRNGKey(0)
    kp, kx = jax.random.split(key)
    params = init_params(kp, cfg)

    B, C, L = 2, cfg["input_channels"], 8
    x = jax.random.normal(kx, (B, C, L), dtype=jnp.float32)

    out = jax.block_until_ready(hifi_forward(params, cfg, x))
    ref = jax.block_until_ready(ref_forward(params, cfg, x))

    assert out.shape == (B, 1, L * 2 * 2), out.shape
    np.testing.assert_allclose(np.asarray(out), np.asarray(ref), rtol=2e-2, atol=2e-2)

    print("KERNEL_OK")
</pallas_src>

<mosaic_0001>
module attributes {stable_mosaic.version = 11 : i64} {
  func.func @kernel(%arg0: i32, %arg1: i32, %arg2: memref<1x16x128xbf16, #tpu.memory_space<vmem>>, %arg3: memref<1x16x128xbf16, #tpu.memory_space<vmem>>, %arg4: memref<7x32x16xbf16, #tpu.memory_space<vmem>>, %arg5: memref<32x1xf32, #tpu.memory_space<vmem>>, %arg6: memref<1x32x128xbf16, #tpu.memory_space<vmem>>, %arg7: memref<16x256xbf16, #tpu.memory_space<vmem>>) attributes {dimension_semantics = [#tpu.dimension_semantics<parallel>, #tpu.dimension_semantics<parallel>], iteration_bounds = array<i64: 2, 1>, scalar_prefetch = 0 : i64, scratch_operands = 1 : i64, tpu.core_type = #tpu.core_type<tc>, window_params = [{transform_indices = @transform_0, window_bounds = array<i64: 1, 16, 128>}, {transform_indices = @transform_1, window_bounds = array<i64: 1, 16, 128>}, {pipeline_mode = #tpu.pipeline_mode<synchronous>, transform_indices = @transform_2, window_bounds = array<i64: 7, 32, 16>}, {pipeline_mode = #tpu.pipeline_mode<synchronous>, transform_indices = @transform_3, window_bounds = array<i64: 32, 1>}, {transform_indices = @transform_4, window_bounds = array<i64: 1, 32, 128>}]} {
    %c0 = arith.constant 0 : index
    %c0_0 = arith.constant 0 : index
    %c0_1 = arith.constant 0 : index
    %0 = vector.load %arg2[%c0, %c0_0, %c0_1] : memref<1x16x128xbf16, #tpu.memory_space<vmem>>, vector<1x16x128xbf16>
    %1 = vector.shape_cast %0 : vector<1x16x128xbf16> to vector<16x128xbf16>
    %2 = arith.extf %1 : vector<16x128xbf16> to vector<16x128xf32>
    %3 = arith.truncf %2 : vector<16x128xf32> to vector<16x128xbf16>
    %c0_2 = arith.constant 0 : index
    %c0_3 = arith.constant 0 : index
    %4 = vector.load %arg7[%c0_2, %c0_3] : memref<16x256xbf16, #tpu.memory_space<vmem>>, vector<16x128xbf16>
    tpu.vector_store %arg7[%c0_2, %c0_3], %3 {strides = array<i32>} : memref<16x256xbf16, #tpu.memory_space<vmem>>, vector<16x128xbf16>,
    %c0_4 = arith.constant 0 : index
    %c0_5 = arith.constant 0 : index
    %c0_6 = arith.constant 0 : index
    %5 = vector.load %arg3[%c0_4, %c0_5, %c0_6] : memref<1x16x128xbf16, #tpu.memory_space<vmem>>, vector<1x16x128xbf16>
    %6 = vector.shape_cast %5 : vector<1x16x128xbf16> to vector<16x128xbf16>
    %7 = arith.extf %6 : vector<16x128xbf16> to vector<16x128xf32>
    %8 = arith.truncf %7 : vector<16x128xf32> to vector<16x128xbf16>
    %c0_7 = arith.constant 0 : index
    %c128 = arith.constant 128 : index
    %9 = vector.load %arg7[%c0_7, %c128] : memref<16x256xbf16, #tpu.memory_space<vmem>>, vector<16x128xbf16>
    tpu.vector_store %arg7[%c0_7, %c128], %8 {strides = array<i32>} : memref<16x256xbf16, #tpu.memory_space<vmem>>, vector<16x128xbf16>,
    %cst = arith.constant 0.000000e+00 : f32
    %10 = vector.broadcast %cst : f32 to vector<32x128xf32>
    %c0_8 = arith.constant 0 : index
    %c0_9 = arith.constant 0 : index
    %c0_10 = arith.constant 0 : index
    %11 = vector.load %arg4[%c0_8, %c0_9, %c0_10] : memref<7x32x16xbf16, #tpu.memory_space<vmem>>, vector<1x32x16xbf16>
    %12 = vector.shape_cast %11 : vector<1x32x16xbf16> to vector<32x16xbf16>
    %c0_11 = arith.constant 0 : index
    %c0_12 = arith.constant 0 : index
    %13 = vector.load %arg7[%c0_11, %c0_12] : memref<16x256xbf16, #tpu.memory_space<vmem>>, vector<16x128xbf16>
    %cst_13 = arith.constant dense<0.000000e+00> : vector<32x128xf32>
    %14 = tpu.matmul %12, %13, %cst_13 {dimension_numbers = #tpu.dot_dimension_numbers<[1], [0], [0], [1], [0, 0, 1, 1], [], []>} : vector<32x16xbf16>, vector<16x128xbf16>, vector<32x128xf32> -> vector<32x128xf32>
    %15 = arith.addf %10, %14 : vector<32x128xf32>
    %c1 = arith.constant 1 : index
    %c0_14 = arith.constant 0 : index
    %c0_15 = arith.constant 0 : index
    %16 = vector.load %arg4[%c1, %c0_14, %c0_15] : memref<7x32x16xbf16, #tpu.memory_space<vmem>>, vector<1x32x16xbf16>
    %17 = vector.shape_cast %16 : vector<1x32x16xbf16> to vector<32x16xbf16>
    %c0_16 = arith.constant 0 : index
    %c1_17 = arith.constant 1 : index
    %18 = vector.load %arg7[%c0_16, %c1_17] : memref<16x256xbf16, #tpu.memory_space<vmem>>, vector<16x128xbf16>
    %cst_18 = arith.constant dense<0.000000e+00> : vector<32x128xf32>
    %19 = tpu.matmul %17, %18, %cst_18 {dimension_numbers = #tpu.dot_dimension_numbers<[1], [0], [0], [1], [0, 0, 1, 1], [], []>} : vector<32x16xbf16>, vector<16x128xbf16>, vector<32x128xf32> -> vector<32x128xf32>
    %20 = arith.addf %15, %19 : vector<32x128xf32>
    %c2 = arith.constant 2 : index
    %c0_19 = arith.constant 0 : index
    %c0_20 = arith.constant 0 : index
    %21 = vector.load %arg4[%c2, %c0_19, %c0_20] : memref<7x32x16xbf16, #tpu.memory_space<vmem>>, vector<1x32x16xbf16>
    %22 = vector.shape_cast %21 : vector<1x32x16xbf16> to vector<32x16xbf16>
    %c0_21 = arith.constant 0 : index
    %c2_22 = arith.constant 2 : index
    %23 = vector.load %arg7[%c0_21, %c2_22] : memref<16x256xbf16, #tpu.memory_space<vmem>>, vector<16x128xbf16>
    %cst_23 = arith.constant dense<0.000000e+00> : vector<32x128xf32>
    %24 = tpu.matmul %22, %23, %cst_23 {dimension_numbers = #tpu.dot_dimension_numbers<[1], [0], [0], [1], [0, 0, 1, 1], [], []>} : vector<32x16xbf16>, vector<16x128xbf16>, vector<32x128xf32> -> vector<32x128xf32>
    %25 = arith.addf %20, %24 : vector<32x128xf32>
    %c3 = arith.constant 3 : index
    %c0_24 = arith.constant 0 : index
    %c0_25 = arith.constant 0 : index
    %26 = vector.load %arg4[%c3, %c0_24, %c0_25] : memref<7x32x16xbf16, #tpu.memory_space<vmem>>, vector<1x32x16xbf16>
    %27 = vector.shape_cast %26 : vector<1x32x16xbf16> to vector<32x16xbf16>
    %c0_26 = arith.constant 0 : index
    %c3_27 = arith.constant 3 : index
    %28 = vector.load %arg7[%c0_26, %c3_27] : memref<16x256xbf16, #tpu.memory_space<vmem>>, vector<16x128xbf16>
    %cst_28 = arith.constant dense<0.000000e+00> : vector<32x128xf32>
    %29 = tpu.matmul %27, %28, %cst_28 {dimension_numbers = #tpu.dot_dimension_numbers<[1], [0], [0], [1], [0, 0, 1, 1], [], []>} : vector<32x16xbf16>, vector<16x128xbf16>, vector<32x128xf32> -> vector<32x128xf32>
    %30 = arith.addf %25, %29 : vector<32x128xf32>
    %c4 = arith.constant 4 : index
    %c0_29 = arith.constant 0 : index
    %c0_30 = arith.constant 0 : index
    %31 = vector.load %arg4[%c4, %c0_29, %c0_30] : memref<7x32x16xbf16, #tpu.memory_space<vmem>>, vector<1x32x16xbf16>
    %32 = vector.shape_cast %31 : vector<1x32x16xbf16> to vector<32x16xbf16>
    %c0_31 = arith.constant 0 : index
    %c4_32 = arith.constant 4 : index
    %33 = vector.load %arg7[%c0_31, %c4_32] : memref<16x256xbf16, #tpu.memory_space<vmem>>, vector<16x128xbf16>
    %cst_33 = arith.constant dense<0.000000e+00> : vector<32x128xf32>
    %34 = tpu.matmul %32, %33, %cst_33 {dimension_numbers = #tpu.dot_dimension_numbers<[1], [0], [0], [1], [0, 0, 1, 1], [], []>} : vector<32x16xbf16>, vector<16x128xbf16>, vector<32x128xf32> -> vector<32x128xf32>
    %35 = arith.addf %30, %34 : vector<32x128xf32>
    %c5 = arith.constant 5 : index
    %c0_34 = arith.constant 0 : index
    %c0_35 = arith.constant 0 : index
    %36 = vector.load %arg4[%c5, %c0_34, %c0_35] : memref<7x32x16xbf16, #tpu.memory_space<vmem>>, vector<1x32x16xbf16>
    %37 = vector.shape_cast %36 : vector<1x32x16xbf16> to vector<32x16xbf16>
    %c0_36 = arith.constant 0 : index
    %c5_37 = arith.constant 5 : index
    %38 = vector.load %arg7[%c0_36, %c5_37] : memref<16x256xbf16, #tpu.memory_space<vmem>>, vector<16x128xbf16>
    %cst_38 = arith.constant dense<0.000000e+00> : vector<32x128xf32>
    %39 = tpu.matmul %37, %38, %cst_38 {dimension_numbers = #tpu.dot_dimension_numbers<[1], [0], [0], [1], [0, 0, 1, 1], [], []>} : vector<32x16xbf16>, vector<16x128xbf16>, vector<32x128xf32> -> vector<32x128xf32>
    %40 = arith.addf %35, %39 : vector<32x128xf32>
    %c6 = arith.constant 6 : index
    %c0_39 = arith.constant 0 : index
    %c0_40 = arith.constant 0 : index
    %41 = vector.load %arg4[%c6, %c0_39, %c0_40] : memref<7x32x16xbf16, #tpu.memory_space<vmem>>, vector<1x32x16xbf16>
    %42 = vector.shape_cast %41 : vector<1x32x16xbf16> to vector<32x16xbf16>
    %c0_41 = arith.constant 0 : index
    %c6_42 = arith.constant 6 : index
    %43 = vector.load %arg7[%c0_41, %c6_42] : memref<16x256xbf16, #tpu.memory_space<vmem>>, vector<16x128xbf16>
    %cst_43 = arith.constant dense<0.000000e+00> : vector<32x128xf32>
    %44 = tpu.matmul %42, %43, %cst_43 {dimension_numbers = #tpu.dot_dimension_numbers<[1], [0], [0], [1], [0, 0, 1, 1], [], []>} : vector<32x16xbf16>, vector<16x128xbf16>, vector<32x128xf32> -> vector<32x128xf32>
    %45 = arith.addf %40, %44 : vector<32x128xf32>
    %c0_44 = arith.constant 0 : index
    %c0_45 = arith.constant 0 : index
    %46 = vector.load %arg5[%c0_44, %c0_45] : memref<32x1xf32, #tpu.memory_space<vmem>>, vector<32x1xf32>
    %47 = vector.broadcast %46 : vector<32x1xf32> to vector<32x128xf32>
    %48 = arith.addf %45, %47 : vector<32x128xf32>
    %49 = arith.truncf %48 : vector<32x128xf32> to vector<32x128xbf16>
    %c0_46 = arith.constant 0 : index
    %c0_47 = arith.constant 0 : index
    %c0_48 = arith.constant 0 : index
    %50 = vector.load %arg6[%c0_46, %c0_47, %c0_48] : memref<1x32x128xbf16, #tpu.memory_space<vmem>>, vector<1x32x128xbf16>
    %51 = vector.shape_cast %50 : vector<1x32x128xbf16> to vector<32x128xbf16>
    %52 = vector.shape_cast %49 : vector<32x128xbf16> to vector<1x32x128xbf16>
    tpu.vector_store %arg6[%c0_46, %c0_47, %c0_48], %52 {strides = array<i32>} : memref<1x32x128xbf16, #tpu.memory_space<vmem>>, vector<1x32x128xbf16>,
    return
  }
  func.func @transform_0(%arg0: i32, %arg1: i32) -> (i32, i32, i32) {
    %c0_i32 = arith.constant 0 : i32
    %c0_i32_0 = arith.constant 0 : i32
    return %arg0, %c0_i32, %arg1 : i32, i32, i32
  }
  func.func @transform_1(%arg0: i32, %arg1: i32) -> (i32, i32, i32) {
    %c1_i32 = arith.constant 1 : i32
    %0 = arith.addi %arg1, %c1_i32 : i32
    %c1_i32_0 = arith.constant 1 : i32
    %1 = arith.muli %0, %c1_i32_0 : i32
    %c0_i32 = arith.constant 0 : i32
    %c0_i32_1 = arith.constant 0 : i32
    return %arg0, %c0_i32, %1 : i32, i32, i32
  }
  func.func @transform_2(%arg0: i32, %arg1: i32) -> (i32, i32, i32) {
    %c0_i32 = arith.constant 0 : i32
    %c0_i32_0 = arith.constant 0 : i32
    %c0_i32_1 = arith.constant 0 : i32
    %c0_i32_2 = arith.constant 0 : i32
    return %c0_i32, %c0_i32_0, %c0_i32_1 : i32, i32, i32
  }
  func.func @transform_3(%arg0: i32, %arg1: i32) -> (i32, i32) {
    %c0_i32 = arith.constant 0 : i32
    %c0_i32_0 = arith.constant 0 : i32
    %c0_i32_1 = arith.constant 0 : i32
    return %c0_i32, %c0_i32_0 : i32, i32
  }
  func.func @transform_4(%arg0: i32, %arg1: i32) -> (i32, i32, i32) {
    %c0_i32 = arith.constant 0 : i32
    %c0_i32_0 = arith.constant 0 : i32
    return %arg0, %c0_i32, %arg1 : i32, i32, i32
  }
}

</mosaic_0001>

<llo_original>
// kernel: tpu_custom_call.1
$region0: #{tpu_custom_call.1}
  #allocation0 [shape = 'u32[]', space=smem, size = 0x4, offset = 0x4, fixed_abs, tag = 'smem constant byte address 0x4 - core index']
  #allocation1 [shape = 'u32[144,128]{1,0:T(1,128)}', space=vmem, size = 0x12000, scoped, tag = 'internal scratch']
  #allocation2 [shape = 'bf16[16,256]{1,0:T(8,128)(2,1)}', space=vmem, size = 0x2000, scoped, tag = 'scratch operand']
  %s0 = inlined_call_operand.vmem [shape: bf16[2,16,256], index: 0, kind: input, shape index: {}]
  %s1 = inlined_call_operand.vmem [shape: bf16[2,16,256], index: 1, kind: input, shape index: {}]
  %s2 = inlined_call_operand.vmem [shape: bf16[7,32,16], index: 2, kind: input, shape index: {}]
  %s3 = inlined_call_operand.vmem [shape: f32[32,1], index: 3, kind: input, shape index: {}]
  %s4 = inlined_call_operand.vmem [shape: bf16[2,32,8], index: 4, kind: output, shape index: {}]
  %s5 = sld [smem:[#allocation0]]
  $region131: #{tpu_custom_call.1} parent=0
    _
  %s7 = ssub.s32 1, %s5
  %s8 = scalar_select 0, %s7, %s5
  $region1: #{tpu_custom_call.1} parent=0
    #allocation3 [shape = 'u8[8192]{0}', space=vmem, size = 0x2000, scoped, tag = 'input window, operand 0']
    #allocation4 [shape = 'u8[8192]{0}', space=vmem, size = 0x2000, scoped, tag = 'input window, operand 1']
    loop: start=0, step=1, limit=4
    $region2: #{tpu_custom_call.1} parent=1 // loop_pre_header
      _
    $region3: #{tpu_custom_call.1} parent=1 // loop_header
      %s10 = sphi 0, %s14
      %p11 = scmp.ge.s32.totalorder %s10, 4
      %s17 = sphi 0, %s29
      %s18 = sphi 0, %s25
      %s19 = sphi 0, %s17
      %s20 = sphi 0, %s18
      %s21 = sphi 0, %s19
      %s22 = sphi 0, %s20
      %s34 = sphi 0, %s36
      %s37 = sphi 0, %s34
      %s38 = sphi 0, %s37
      %s54 = sphi 0, %s38
      %s64 = sphi 0, %s66
      %s67 = sphi 0, %s64
      %s68 = sphi 0, %s67
      %s84 = sphi 0, %s68
      %s88 = sphi 0, %s88
      %s90 = sphi 0, %s88
      %s91 = sphi 0, %s90
      %s105 = sphi 0, %s91
      %s109 = sphi 0, %s109
      %s111 = sphi 0, %s109
      %s112 = sphi 0, %s111
      %s126 = sphi 0, %s112
      %s134 = sphi 0, %s136
      %s137 = sphi 0, %s134
      %s138 = sphi 0, %s137
      %s154 = sphi 0, %s138
    $region4: #{tpu_custom_call.1} parent=1 // loop_header_branch
      %13 = sbr.rel (%p11) target = $region8
    $region5: #{tpu_custom_call.1} parent=1 // loop_body
      %s15 = ssub.s32 %s10, 1
      %s16 = ssub.s32 %s10, 2
      %s23 = sadd.s32 1, %s18
      %p24 = scmp.ge.s32.totalorder %s23, 1
      %s25 = scalar_select %p24, 0, %s23
      %s26 = sadd.s32 1, %s17
      %s27 = scalar_select %p24, %s26, %s17
      %p28 = scmp.ge.s32.totalorder %s27, 2
      %s29 = scalar_select %p28, 0, %s27
      %s30 = ssub.s32 %s17, %s29
      %s31 = ssub.s32 %s18, %s25
      %s32 = sor.u32 %s30, %s31
      %p33 = scmp.eq.s32.totalorder %s32, 0
      %s35 = sadd.s32 %s34, 1
      %s36 = scalar_select %p33, %s34, %s35
      %p39 = pneg %p33
      %p40 = scmp.eq.s32.totalorder %s10, 1
      %p41 = por %p39, %p40
      %p42 = scmp.ne.s32.totalorder %s34, %s37
      %p43 = scmp.eq.s32.totalorder %s10, 0
      %p44 = por %p42, %p43
      %p45 = scmp.ne.s32.totalorder %s34, %s37
      %p46 = scmp.eq.s32.totalorder %s15, 1
      %p47 = por %p45, %p46
      %p48 = scmp.ne.s32.totalorder %s37, %s38
      %p49 = scmp.eq.s32.totalorder %s15, 0
      %p50 = por %p48, %p49
      %p51 = scmp.ne.s32.totalorder %s37, %s38
      %p52 = scmp.eq.s32.totalorder %s16, 1
      %p53 = por %p51, %p52
      %p55 = scmp.ne.s32.totalorder %s38, %s54
      %p56 = scmp.eq.s32.totalorder %s16, 0
      %p57 = por %p55, %p56
      %s58 = sadd.s32 %s18, 1
      %s59 = sadd.s32 %s25, 1
      %s60 = ssub.s32 %s17, %s29
      %s61 = ssub.s32 %s58, %s59
      %s62 = sor.u32 %s60, %s61
      %p63 = scmp.eq.s32.totalorder %s62, 0
      %s65 = sadd.s32 %s64, 1
      %s66 = scalar_select %p63, %s64, %s65
      %p69 = pneg %p63
      %p70 = scmp.eq.s32.totalorder %s10, 1
      %p71 = por %p69, %p70
      %p72 = scmp.ne.s32.totalorder %s64, %s67
      %p73 = scmp.eq.s32.totalorder %s10, 0
      %p74 = por %p72, %p73
      %p75 = scmp.ne.s32.totalorder %s64, %s67
      %p76 = scmp.eq.s32.totalorder %s15, 1
      %p77 = por %p75, %p76
      %p78 = scmp.ne.s32.totalorder %s67, %s68
      %p79 = scmp.eq.s32.totalorder %s15, 0
      %p80 = por %p78, %p79
      %p81 = scmp.ne.s32.totalorder %s67, %s68
      %p82 = scmp.eq.s32.totalorder %s16, 1
      %p83 = por %p81, %p82
      %p85 = scmp.ne.s32.totalorder %s68, %s84
      %p86 = scmp.eq.s32.totalorder %s16, 0
      %p87 = por %p85, %p86
      %s89 = sadd.s32 %s88, 1
      %p92 = scmp.eq.s32.totalorder %s10, 1
      %p93 = scmp.ne.s32.totalorder %s88, %s90
      %p94 = scmp.eq.s32.totalorder %s10, 0
      %p95 = por %p93, %p94
      %p96 = scmp.ne.s32.totalorder %s88, %s90
      %p97 = scmp.eq.s32.totalorder %s15, 1
      %p98 = por %p96, %p97
      %p99 = scmp.ne.s32.totalorder %s90, %s91
      %p100 = scmp.eq.s32.totalorder %s15, 0
      %p101 = por %p99, %p100
      %p102 = scmp.ne.s32.totalorder %s90, %s91
      %p103 = scmp.eq.s32.totalorder %s16, 1
      %p104 = por %p102, %p103
      %p106 = scmp.ne.s32.totalorder %s91, %s105
      %p107 = scmp.eq.s32.totalorder %s16, 0
      %p108 = por %p106, %p107
      %s110 = sadd.s32 %s109, 1
      %p113 = scmp.eq.s32.totalorder %s10, 1
      %p114 = scmp.ne.s32.totalorder %s109, %s111
      %p115 = scmp.eq.s32.totalorder %s10, 0
      %p116 = por %p114, %p115
      %p117 = scmp.ne.s32.totalorder %s109, %s111
      %p118 = scmp.eq.s32.totalorder %s15, 1
      %p119 = por %p117, %p118
      %p120 = scmp.ne.s32.totalorder %s111, %s112
      %p121 = scmp.eq.s32.totalorder %s15, 0
      %p122 = por %p120, %p121
      %p123 = scmp.ne.s32.totalorder %s111, %s112
      %p124 = scmp.eq.s32.totalorder %s16, 1
      %p125 = por %p123, %p124
      %p127 = scmp.ne.s32.totalorder %s112, %s126
      %p128 = scmp.eq.s32.totalorder %s16, 0
      %p129 = por %p127, %p128
      %s130 = ssub.s32 %s17, %s29
      %s131 = ssub.s32 %s18, %s25
      %s132 = sor.u32 %s130, %s131
      %p133 = scmp.eq.s32.totalorder %s132, 0
      %s135 = sadd.s32 %s134, 1
      %s136 = scalar_select %p133, %s134, %s135
      %p139 = pneg %p133
      %p140 = scmp.eq.s32.totalorder %s10, 1
      %p141 = por %p139, %p140
      %p142 = scmp.ne.s32.totalorder %s134, %s137
      %p143 = scmp.eq.s32.totalorder %s10, 0
      %p144 = por %p142, %p143
      %p145 = scmp.ne.s32.totalorder %s134, %s137
      %p146 = scmp.eq.s32.totalorder %s15, 1
      %p147 = por %p145, %p146
      %p148 = scmp.ne.s32.totalorder %s137, %s138
      %p149 = scmp.eq.s32.totalorder %s15, 0
      %p150 = por %p148, %p149
      %p151 = scmp.ne.s32.totalorder %s137, %s138
      %p152 = scmp.eq.s32.totalorder %s16, 1
      %p153 = por %p151, %p152
      %p155 = scmp.ne.s32.totalorder %s138, %s154
      %p156 = scmp.eq.s32.totalorder %s16, 0
      %p157 = por %p155, %p156
      %p158 = scmp.le.s32.totalorder 1, %s10
      %p159 = scmp.lt.s32.totalorder %s10, 3
      %p160 = pnand %p158, %p159
      %p161 = pneg %p160
      // Predicated region
      $region9: #{tpu_custom_call.1} parent=5 // pred_check
        _
      $region10: #{tpu_custom_call.1} parent=5 // pred_check_branch
        %163 = sbr.rel (%p160) target = $region12
      $region11: #{tpu_custom_call.1} parent=5 // pred_region
        %s164 = ssub.s32 %s10, 1
        // Predicated region
        $region13: #{tpu_custom_call.1} parent=11 // pred_check
          %p165 = pneg %p101
        $region14: #{tpu_custom_call.1} parent=11 // pred_check_branch
          %167 = sbr.rel (%p165) target = $region16
        $region15: #{tpu_custom_call.1} parent=11 // pred_region
          _
        $region16: #{tpu_custom_call.1} parent=11 // pred_fallthru
          _
        // Predicated region
        $region17: #{tpu_custom_call.1} parent=11 // pred_check
          %p168 = pneg %p122
        $region18: #{tpu_custom_call.1} parent=11 // pred_check_branch
          %170 = sbr.rel (%p168) target = $region20
        $region19: #{tpu_custom_call.1} parent=11 // pred_region
          _
        $region20: #{tpu_custom_call.1} parent=11 // pred_fallthru
          _
      $region12: #{tpu_custom_call.1} parent=5 // pred_fallthru
        _
      %p171 = scmp.lt.s32.totalorder %s10, 2
      // Predicated region
      $region21: #{tpu_custom_call.1} parent=5 // pred_check
        %p172 = pneg %p171
      $region22: #{tpu_custom_call.1} parent=5 // pred_check_branch
        %174 = sbr.rel (%p172) target = $region24
      $region23: #{tpu_custom_call.1} parent=5 // pred_region
        // Predicated region
        $region25: #{tpu_custom_call.1} parent=23 // pred_check
          %p175 = pneg %p44
        $region26: #{tpu_custom_call.1} parent=23 // pred_check_branch
          %177 = sbr.rel (%p175) target = $region28
        $region27: #{tpu_custom_call.1} parent=23 // pred_region
          %s178 = sand.u32 %s34, 1
          %s179 = sand.u32 %s34, 1
          %s180 = smul.addr %s179, 8
          %s181 = scalar_lea.vmem [#allocation3], %s180
          %s182 = smul.addr %s17, 4
          %s183 = sadd.s32 %s18, %s182
          %s184 = smul.addr %s183, 4
          %s185 = scalar_lea.vmem %s0, %s184
          // Predicated region
          $region29: #{tpu_custom_call.1} parent=27 // pred_check
            _
          $region30: #{tpu_custom_call.1} parent=27 // pred_check_branch
            %187 = sbr.rel (0) target = $region32
          $region31: #{tpu_custom_call.1} parent=27 // pred_region
            // Predicated region
            $region33: #{tpu_custom_call.1} parent=31 // pred_check
              _
            $region34: #{tpu_custom_call.1} parent=31 // pred_check_branch
              %189 = sbr.rel target = $region36
            $region35: #{tpu_custom_call.1} parent=31 // pred_region
              // Predicated region
              $region48: #{tpu_custom_call.1} parent=35 // pred_check
                _
              $region49: #{tpu_custom_call.1} parent=35 // pred_check_branch
                %207 = sbr.rel (0) target = $region51
              $region50: #{tpu_custom_call.1} parent=35 // pred_region
                loop: start=0, step=1, limit=1
                $region52: #{tpu_custom_call.1} parent=50 // loop_pre_header
                  _
                $region53: #{tpu_custom_call.1} parent=50 // loop_header
                  %s209 = sphi 0, %s213
                  %p210 = scmp.ge.s32.totalorder %s209, 1
                  %s214 = sphi %s185, %s185
                  %s215 = sphi %s181, %s181
                $region54: #{tpu_custom_call.1} parent=50 // loop_header_branch
                  %212 = sbr.rel (%p210) target = $region58
                $region55: #{tpu_custom_call.1} parent=50 // loop_body
                  _
                $region56: #{tpu_custom_call.1} parent=50 // loop_footer
                  %s213 = sadd.s32 1, %s209
                $region57: #{tpu_custom_call.1} parent=50 // loop_footer_branch
                  %208 = sbr.rel target = $region53
                $region58: #{tpu_custom_call.1} parent=50 // loop_exit
                  _
                %s217 = ssub.s32 16, 1
                loop: start=0, step=1, limit=1
                $region59: #{tpu_custom_call.1} parent=50 // loop_pre_header
                  _
                $region60: #{tpu_custom_call.1} parent=50 // loop_header
                  %s219 = sphi 0, %s223
                  %p220 = scmp.ge.s32.totalorder %s219, 1
                  %s224 = sphi %s185, %s185
                  %s225 = sphi %s181, %s181
                $region61: #{tpu_custom_call.1} parent=50 // loop_header_branch
                  %222 = sbr.rel (%p220) target = $region65
                $region62: #{tpu_custom_call.1} parent=50 // loop_body
                  %v226 = vld [vmem:[%s224] sm:%s217]
                  %227 = vst [vmem:[%s225] sm:%s217] %v226
                  %v228 = vld [vmem:[%s224 + $0x8] sm:%s217]
                  %229 = vst [vmem:[%s225 + $0x4] sm:%s217] %v228
                $region63: #{tpu_custom_call.1} parent=50 // loop_footer
                  %s223 = sadd.s32 1, %s219
                $region64: #{tpu_custom_call.1} parent=50 // loop_footer_branch
                  %218 = sbr.rel target = $region60
                $region65: #{tpu_custom_call.1} parent=50 // loop_exit
                  _
              $region51: #{tpu_custom_call.1} parent=35 // pred_fallthru
                _
            $region36: #{tpu_custom_call.1} parent=31 // pred_fallthru
              _
            // Predicated region
            $region37: #{tpu_custom_call.1} parent=31 // pred_check
              _
            $region38: #{tpu_custom_call.1} parent=31 // pred_check_branch
              %191 = sbr.rel (0) target = $region40
            $region39: #{tpu_custom_call.1} parent=31 // pred_region
              %s193 = ssub.s32 16, 1
              loop: start=0, step=1, limit=1
              $region41: #{tpu_custom_call.1} parent=39 // loop_pre_header
                _
              $region42: #{tpu_custom_call.1} parent=39 // loop_header
                %s195 = sphi 0, %s199
                %p196 = scmp.ge.s32.totalorder %s195, 1
                %s200 = sphi %s185, %s185
                %s201 = sphi %s181, %s181
              $region43: #{tpu_custom_call.1} parent=39 // loop_header_branch
                %198 = sbr.rel (%p196) target = $region47
              $region44: #{tpu_custom_call.1} parent=39 // loop_body
                %v202 = vld [vmem:[%s200] sm:%s193]
                %203 = vst [vmem:[%s201] sm:%s193] %v202
                %v204 = vld [vmem:[%s200 + $0x8] sm:%s193]
                %205 = vst [vmem:[%s201 + $0x4] sm:%s193] %v204
              $region45: #{tpu_custom_call.1} parent=39 // loop_footer
                %s199 = sadd.s32 1, %s195
              $region46: #{tpu_custom_call.1} parent=39 // loop_footer_branch
                %194 = sbr.rel target = $region42
              $region47: #{tpu_custom_call.1} parent=39 // loop_exit
                _
            $region40: #{tpu_custom_call.1} parent=31 // pred_fallthru
              _
          $region32: #{tpu_custom_call.1} parent=27 // pred_fallthru
            _
          %230 = vnop
        $region28: #{tpu_custom_call.1} parent=23 // pred_fallthru
          _
        // Predicated region
        $region66: #{tpu_custom_call.1} parent=23 // pred_check
          %p231 = pneg %p74
        $region67: #{tpu_custom_call.1} parent=23 // pred_check_branch
          %233 = sbr.rel (%p231) target = $region69
        $region68: #{tpu_custom_call.1} parent=23 // pred_region
          %s234 = sand.u32 %s64, 1
          %s235 = sand.u32 %s64, 1
          %s236 = smul.addr %s235, 8
          %s237 = scalar_lea.vmem [#allocation4], %s236
          %s238 = sadd.s32 %s18, 1
          %s239 = smul.addr %s17, 4
          %s240 = sadd.s32 %s238, %s239
          %s241 = smul.addr %s240, 4
          %s242 = scalar_lea.vmem %s1, %s241
          // Predicated region
          $region70: #{tpu_custom_call.1} parent=68 // pred_check
            _
          $region71: #{tpu_custom_call.1} parent=68 // pred_check_branch
            %244 = sbr.rel (0) target = $region73
          $region72: #{tpu_custom_call.1} parent=68 // pred_region
            // Predicated region
            $region74: #{tpu_custom_call.1} parent=72 // pred_check
              _
            $region75: #{tpu_custom_call.1} parent=72 // pred_check_branch
              %246 = sbr.rel target = $region77
            $region76: #{tpu_custom_call.1} parent=72 // pred_region
              // Predicated region
              $region89: #{tpu_custom_call.1} parent=76 // pred_check
                _
              $region90: #{tpu_custom_call.1} parent=76 // pred_check_branch
                %264 = sbr.rel (0) target = $region92
              $region91: #{tpu_custom_call.1} parent=76 // pred_region
                loop: start=0, step=1, limit=1
                $region93: #{tpu_custom_call.1} parent=91 // loop_pre_header
                  _
                $region94: #{tpu_custom_call.1} parent=91 // loop_header
                  %s266 = sphi 0, %s270
                  %p267 = scmp.ge.s32.totalorder %s266, 1
                  %s271 = sphi %s242, %s242
                  %s272 = sphi %s237, %s237
                $region95: #{tpu_custom_call.1} parent=91 // loop_header_branch
                  %269 = sbr.rel (%p267) target = $region99
                $region96: #{tpu_custom_call.1} parent=91 // loop_body
                  _
                $region97: #{tpu_custom_call.1} parent=91 // loop_footer
                  %s270 = sadd.s32 1, %s266
                $region98: #{tpu_custom_call.1} parent=91 // loop_footer_branch
                  %265 = sbr.rel target = $region94
                $region99: #{tpu_custom_call.1} parent=91 // loop_exit
                  _
                %s274 = ssub.s32 16, 1
                loop: start=0, step=1, limit=1
                $region100: #{tpu_custom_call.1} parent=91 // loop_pre_header
                  _
                $region101: #{tpu_custom_call.1} parent=91 // loop_header
                  %s276 = sphi 0, %s280
                  %p277 = scmp.ge.s32.totalorder %s276, 1
                  %s281 = sphi %s242, %s242
                  %s282 = sphi %s237, %s237
                $region102: #{tpu_custom_call.1} parent=91 // loop_header_branch
                  %279 = sbr.rel (%p277) target = $region106
                $region103: #{tpu_custom_call.1} parent=91 // loop_body
                  %v283 = vld [vmem:[%s281] sm:%s274]
                  %284 = vst [vmem:[%s282] sm:%s274] %v283
                  %v285 = vld [vmem:[%s281 + $0x8] sm:%s274]
                  %286 = vst [vmem:[%s282 + $0x4] sm:%s274] %v285
                $region104: #{tpu_custom_call.1} parent=91 // loop_footer
                  %s280 = sadd.s32 1, %s276
                $region105: #{tpu_custom_call.1} parent=91 // loop_footer_branch
                  %275 = sbr.rel target = $region101
                $region106: #{tpu_custom_call.1} parent=91 // loop_exit
                  _
              $region92: #{tpu_custom_call.1} parent=76 // pred_fallthru
                _
            $region77: #{tpu_custom_call.1} parent=72 // pred_fallthru
              _
            // Predicated region
            $region78: #{tpu_custom_call.1} parent=72 // pred_check
              _
            $region79: #{tpu_custom_call.1} parent=72 // pred_check_branch
              %248 = sbr.rel (0) target = $region81
            $region80: #{tpu_custom_call.1} parent=72 // pred_region
              %s250 = ssub.s32 16, 1
              loop: start=0, step=1, limit=1
              $region82: #{tpu_custom_call.1} parent=80 // loop_pre_header
                _
              $region83: #{tpu_custom_call.1} parent=80 // loop_header
                %s252 = sphi 0, %s256
                %p253 = scmp.ge.s32.totalorder %s252, 1
                %s257 = sphi %s242, %s242
                %s258 = sphi %s237, %s237
              $region84: #{tpu_custom_call.1} parent=80 // loop_header_branch
                %255 = sbr.rel (%p253) target = $region88
              $region85: #{tpu_custom_call.1} parent=80 // loop_body
                %v259 = vld [vmem:[%s257] sm:%s250]
                %260 = vst [vmem:[%s258] sm:%s250] %v259
                %v261 = vld [vmem:[%s257 + $0x8] sm:%s250]
                %262 = vst [vmem:[%s258 + $0x4] sm:%s250] %v261
              $region86: #{tpu_custom_call.1} parent=80 // loop_footer
                %s256 = sadd.s32 1, %s252
              $region87: #{tpu_custom_call.1} parent=80 // loop_footer_branch
                %251 = sbr.rel target = $region83
              $region88: #{tpu_custom_call.1} parent=80 // loop_exit
                _
            $region81: #{tpu_custom_call.1} parent=72 // pred_fallthru
              _
          $region73: #{tpu_custom_call.1} parent=68 // pred_fallthru
            _
          %287 = vnop
        $region69: #{tpu_custom_call.1} parent=23 // pred_fallthru
          _
      $region24: #{tpu_custom_call.1} parent=5 // pred_fallthru
        _
      %p288 = scmp.le.s32.totalorder 1, %s10
      %p289 = scmp.lt.s32.totalorder %s10, 3
      %p290 = pnand %p288, %p289
      %p291 = pneg %p290
      // Predicated region
      $region107: #{tpu_custom_call.1} parent=5 // pred_check
        _
      $region108: #{tpu_custom_call.1} parent=5 // pred_check_branch
        %293 = sbr.rel (%p290) target = $region110
      $region109: #{tpu_custom_call.1} parent=5 // pred_region
        %s294 = ssub.s32 %s10, 1
        %s295 = sand.u32 %s37, 1
        %s296 = sand.u32 %s37, 1
        %s297 = smul.addr %s296, 8
        %s298 = scalar_lea.vmem [#allocation3], %s297
        // Predicated region
        $region111: #{tpu_custom_call.1} parent=109 // pred_check
          %p299 = pneg %p50
        $region112: #{tpu_custom_call.1} parent=109 // pred_check_branch
          %301 = sbr.rel (%p299) target = $region114
        $region113: #{tpu_custom_call.1} parent=109 // pred_region
          _
        $region114: #{tpu_custom_call.1} parent=109 // pred_fallthru
          _
        %s302 = sand.u32 %s67, 1
        %s303 = sand.u32 %s67, 1
        %s304 = smul.addr %s303, 8
        %s305 = scalar_lea.vmem [#allocation4], %s304
        // Predicated region
        $region115: #{tpu_custom_call.1} parent=109 // pred_check
          %p306 = pneg %p80
        $region116: #{tpu_custom_call.1} parent=109 // pred_check_branch
          %308 = sbr.rel (%p306) target = $region118
        $region117: #{tpu_custom_call.1} parent=109 // pred_region
          _
        $region118: #{tpu_custom_call.1} parent=109 // pred_fallthru
          _
        %s309 = sand.u32 %s37, 1
        %s310 = sand.u32 %s37, 1
        %s311 = smul.addr %s310, 8
        %s312 = scalar_lea.vmem [#allocation3], %s311
        %p313 = pneg %p50
        %p314 = pneg %p47
        %s315 = sand.u32 %s67, 1
        %s316 = sand.u32 %s67, 1
        %s317 = smul.addr %s316, 8
        %s318 = scalar_lea.vmem [#allocation4], %s317
        %p319 = pneg %p80
        %p320 = pneg %p77
        %p321 = pneg %p101
        %p322 = pneg %p98
        %p323 = pneg %p122
        %p324 = pneg %p119
        %p325 = pneg %p150
        %p326 = pneg %p147
        %p327 = scmp.lt.s32.totalorder %s19, 1
        %s328 = scalar_select %p327, %s19, 1
        %p329 = scmp.lt.s32.totalorder %s20, 0
        %s330 = scalar_select %p329, %s20, 0
        %s331 = smul.addr %s328, 4
        %s332 = sadd.s32 %s330, %s331
        %s333 = smul.addr %s332, 4
        %s334 = scalar_lea.vmem %s4, %s333
        %s335 = sadd.s32 %s20, 1
        %p336 = scmp.lt.s32.totalorder %s19, 1
        %s337 = scalar_select %p336, %s19, 1
        %p338 = scmp.lt.s32.totalorder %s20, 0
        %s339 = scalar_select %p338, %s20, 0
        %s340 = smul.addr %s337, 4
        %s341 = sadd.s32 %s339, %s340
        %s342 = smul.addr %s341, 4
        %s343 = scalar_lea.vmem %s4, %s342
        %v345 = vld [vmem:[%s298] sm:$0xf]
        %v346 = vld [vmem:[%s298 + $0x4] sm:$0xf]
        %347 = vst [vmem:[#allocation2] sm:$0xf] %v345
        %348 = vst [vmem:[#allocation2 + $0x8] sm:$0xf] %v346
        %v349 = vld [vmem:[%s305] sm:$0xf]
        %v350 = vld [vmem:[%s305 + $0x4] sm:$0xf]
        %351 = vst [vmem:[#allocation2 + $0x4] sm:$0xf] %v349
        %352 = vst [vmem:[#allocation2 + $0xc] sm:$0xf] %v350
        %v353 = vld [vmem:[%s2] sm:$0xf]
        %v354 = vld [vmem:[%s2 + $0x4] sm:$0xf]
        %v355 = vld [vmem:[%s2 + $0x8] sm:$0xf]
        %v356 = vld [vmem:[%s2 + $0xc] sm:$0xf]
        %v357 = vld [vmem:[#allocation2] sm:$0xf]
        %v358 = vld [vmem:[#allocation2 + $0x8] sm:$0xf]
        %s359 = scalar_lea.vmem %s2, 16
        %v360 = vld [vmem:[%s359] sm:$0xf]
        %v361 = vld [vmem:[%s359 + $0x4] sm:$0xf]
        %v362 = vld [vmem:[%s359 + $0x8] sm:$0xf]
        %v363 = vld [vmem:[%s359 + $0xc] sm:$0xf]
        %v364 = vld [vmem:[#allocation2] sm:$0xff]
        %v365 = vld [vmem:[#allocation2 + $0x8] sm:$0xff]
        %v370 = vunpack.c.l.b16 %v360
        %v371 = vunpack.c.l.b16 %v361
        %v372 = vunpack.c.l.b16 %v362
        %v373 = vunpack.c.l.b16 %v363
        %v374 = vpack.c.b16 %v371, %v370
        %v375 = vpack.c.b16 %v373, %v372
        %v378 = vunpack.c.l.b16 %v364
        %v379 = vunpack.c.h.b16 %v364
        %v380 = vunpack.c.l.b16 %v365
        %v381 = vunpack.c.h.b16 %v365
        %v382 = vpack.c.b16 %v380, %v378
        %v383 = vpack.c.b16 %v381, %v379
        %384 = vrot.lane.b32.xlu0 %v382, 127
        %v385 = vpop.permute.xlu0 %384
        %386 = vrot.lane.b32.xlu0 %v383, 127
        %v387 = vpop.permute.xlu0 %386
        %vm388 = vcmask 1039360
        %v389 = vsel %vm388, %v385, %v387
        %vm391 = vcmask 130048
        %v393 = vsel %vm391, %v374, 0
        %v396 = vsel %vm391, %v375, 0
        %398 = vmatprep.subr.bf16.mxu0 0
        %399 = vmatpush1.bf16.msra.mxu0 0
        %400 = vmatprep.subr.bf16.mxu0 0
        %401 = vmatpush1.bf16.msra.mxu0 0
        %402 = vmatprep.subr.bf16.mxu0 0
        %403 = vmatpush1.bf16.msra.mxu0 0
        %404 = vmatprep.subr.bf16.mxu0 0
        %405 = vmatpush1.bf16.msra.mxu0 0
        %406 = vmatprep.subr.bf16.mxu0 0
        %407 = vmatpush1.bf16.msra.mxu0 0
        %408 = vmatprep.subr.bf16.mxu0 0
        %409 = vmatpush1.bf16.msra.mxu0 0
        %410 = vmatprep.subr.bf16.mxu0 0
        %411 = vmatpush1.bf16.msra.mxu0 0
        %412 = vmatprep.subr.bf16.mxu0 0
        %413 = vmatpush1.bf16.msra.mxu0 %v389
        %414 = vmatprep.subr.bf16.mxu0 0
        %415 = vmatpush2.bf16.msra.mxu0 0
        %416 = vmatprep.subr.bf16.mxu0 0
        %417 = vmatpush2.bf16.msra.mxu0 0
        %418 = vmatprep.subr.bf16.mxu0 0
        %419 = vmatpush2.bf16.msra.mxu0 0
        %420 = vmatprep.subr.bf16.mxu0 0
        %421 = vmatpush2.bf16.msra.mxu0 0
        %422 = vmatprep.subr.bf16.mxu0 0
        %423 = vmatpush2.bf16.msra.mxu0 0
        %424 = vmatprep.subr.bf16.mxu0 0
        %425 = vmatpush2.bf16.msra.mxu0 0
        %426 = vmatprep.subr.bf16.mxu0 0
        %427 = vmatpush2.bf16.msra.mxu0 0
        %428 = vmatprep.subr.bf16.mxu0 0
        %429 = vmatpush2.bf16.msra.mxu0 0
        %430 = vmatprep.mubr.bf16.mxu0 0
        %431 = vmatmul.mubr.bf16.gmra.mxu0 %v393
        %v432 = vpop.f32.mrf.mxu0
        %v433 = vadd.f32 0.0, %v432
        %v434 = vpop.f32.mrf.mxu0
        %v435 = vpop.f32.mrf.mxu0
        %v436 = vadd.f32 0.0, %v435
        %v437 = vpop.f32.mrf.mxu0
        %438 = vmatprep.mubr.bf16.mxu0 0
        %439 = vmatmul.mubr.bf16.gmra.mxu0 %v396
        %v440 = vpop.f32.mrf.mxu0
        %v441 = vadd.f32 0.0, %v440
        %v442 = vpop.f32.mrf.mxu0
        %v443 = vpop.f32.mrf.mxu0
        %v444 = vadd.f32 0.0, %v443
        %v445 = vpop.f32.mrf.mxu0
        %446 = vdwg.mxu0
        %v451 = vunpack.c.l.b16 %v353
        %v452 = vunpack.c.l.b16 %v354
        %v453 = vunpack.c.l.b16 %v355
        %v454 = vunpack.c.l.b16 %v356
        %v455 = vpack.c.b16 %v452, %v451
        %v456 = vpack.c.b16 %v454, %v453
        %v459 = vunpack.c.l.b16 %v357
        %v460 = vunpack.c.l.b16 %v358
        %v461 = vpack.c.b16 %v460, %v459
        %v464 = vsel %vm391, %v455, 0
        %v467 = vsel %vm391, %v456, 0
        %469 = vmatprep.subr.bf16.mxu0 0
        %470 = vmatpush1.bf16.msra.mxu0 0
        %471 = vmatprep.subr.bf16.mxu0 0
        %472 = vmatpush1.bf16.msra.mxu0 0
        %473 = vmatprep.subr.bf16.mxu0 0
        %474 = vmatpush1.bf16.msra.mxu0 0
        %475 = vmatprep.subr.bf16.mxu0 0
        %476 = vmatpush1.bf16.msra.mxu0 0
        %477 = vmatprep.subr.bf16.mxu0 0
        %478 = vmatpush1.bf16.msra.mxu0 0
        %479 = vmatprep.subr.bf16.mxu0 0
        %480 = vmatpush1.bf16.msra.mxu0 0
        %481 = vmatprep.subr.bf16.mxu0 0
        %482 = vmatpush1.bf16.msra.mxu0 0
        %483 = vmatprep.subr.bf16.mxu0 0
        %484 = vmatpush1.bf16.msra.mxu0 %v461
        %485 = vmatprep.subr.bf16.mxu0 0
        %486 = vmatpush2.bf16.msra.mxu0 0
        %487 = vmatprep.subr.bf16.mxu0 0
        %488 = vmatpush2.bf16.msra.mxu0 0
        %489 = vmatprep.subr.bf16.mxu0 0
        %490 = vmatpush2.bf16.msra.mxu0 0
        %491 = vmatprep.subr.bf16.mxu0 0
        %492 = vmatpush2.bf16.msra.mxu0 0
        %493 = vmatprep.subr.bf16.mxu0 0
        %494 = vmatpush2.bf16.msra.mxu0 0
        %495 = vmatprep.subr.bf16.mxu0 0
        %496 = vmatpush2.bf16.msra.mxu0 0
        %497 = vmatprep.subr.bf16.mxu0 0
        %498 = vmatpush2.bf16.msra.mxu0 0
        %499 = vmatprep.subr.bf16.mxu0 0
        %500 = vmatpush2.bf16.msra.mxu0 0
        %501 = vmatprep.mubr.bf16.mxu0 0
        %502 = vmatmul.mubr.bf16.gmra.mxu0 %v464
        %v503 = vpop.f32.mrf.mxu0
        %v504 = vadd.f32 %v433, %v503
        %v505 = vpop.f32.mrf.mxu0
        %v506 = vpop.f32.mrf.mxu0
        %v507 = vadd.f32 %v436, %v506
        %v508 = vpop.f32.mrf.mxu0
        %509 = vmatprep.mubr.bf16.mxu0 0
        %510 = vmatmul.mubr.bf16.gmra.mxu0 %v467
        %v511 = vpop.f32.mrf.mxu0
        %v512 = vadd.f32 %v441, %v511
        %v513 = vpop.f32.mrf.mxu0
        %v514 = vpop.f32.mrf.mxu0
        %v515 = vadd.f32 %v444, %v514
        %v516 = vpop.f32.mrf.mxu0
        %517 = vdwg.mxu0
        %s518 = scalar_lea.vmem %s2, 32
        %v519 = vld [vmem:[%s518] sm:$0xf]
        %v520 = vld [vmem:[%s518 + $0x4] sm:$0xf]
        %v521 = vld [vmem:[%s518 + $0x8] sm:$0xf]
        %v522 = vld [vmem:[%s518 + $0xc] sm:$0xf]
        %v527 = vunpack.c.l.b16 %v519
        %v528 = vunpack.c.l.b16 %v520
        %v529 = vunpack.c.l.b16 %v521
        %v530 = vunpack.c.l.b16 %v522
        %v531 = vpack.c.b16 %v528, %v527
        %v532 = vpack.c.b16 %v530, %v529
        %533 = vrot.lane.b32.xlu0 %v382, 126
        %v534 = vpop.permute.xlu0 %533
        %535 = vrot.lane.b32.xlu0 %v383, 126
        %v536 = vpop.permute.xlu0 %535
        %vm537 = vcmask 1031168
        %v538 = vsel %vm537, %v534, %v536
        %v541 = vsel %vm391, %v531, 0
        %v544 = vsel %vm391, %v532, 0
        %546 = vmatprep.subr.bf16.mxu0 0
        %547 = vmatpush1.bf16.msra.mxu0 0
        %548 = vmatprep.subr.bf16.mxu0 0
        %549 = vmatpush1.bf16.msra.mxu0 0
        %550 = vmatprep.subr.bf16.mxu0 0
        %551 = vmatpush1.bf16.msra.mxu0 0
        %552 = vmatprep.subr.bf16.mxu0 0
        %553 = vmatpush1.bf16.msra.mxu0 0
        %554 = vmatprep.subr.bf16.mxu0 0
        %555 = vmatpush1.bf16.msra.mxu0 0
        %556 = vmatprep.subr.bf16.mxu0 0
        %557 = vmatpush1.bf16.msra.mxu0 0
        %558 = vmatprep.subr.bf16.mxu0 0
        %559 = vmatpush1.bf16.msra.mxu0 0
        %560 = vmatprep.subr.bf16.mxu0 0
        %561 = vmatpush1.bf16.msra.mxu0 %v538
        %562 = vmatprep.subr.bf16.mxu0 0
        %563 = vmatpush2.bf16.msra.mxu0 0
        %564 = vmatprep.subr.bf16.mxu0 0
        %565 = vmatpush2.bf16.msra.mxu0 0
        %566 = vmatprep.subr.bf16.mxu0 0
        %567 = vmatpush2.bf16.msra.mxu0 0
        %568 = vmatprep.subr.bf16.mxu0 0
        %569 = vmatpush2.bf16.msra.mxu0 0
        %570 = vmatprep.subr.bf16.mxu0 0
        %571 = vmatpush2.bf16.msra.mxu0 0
        %572 = vmatprep.subr.bf16.mxu0 0
        %573 = vmatpush2.bf16.msra.mxu0 0
        %574 = vmatprep.subr.bf16.mxu0 0
        %575 = vmatpush2.bf16.msra.mxu0 0
        %576 = vmatprep.subr.bf16.mxu0 0
        %577 = vmatpush2.bf16.msra.mxu0 0
        %578 = vmatprep.mubr.bf16.mxu0 0
        %579 = vmatmul.mubr.bf16.gmra.mxu0 %v541
        %v580 = vpop.f32.mrf.mxu0
        %v581 = vadd.f32 0.0, %v580
        %v582 = vpop.f32.mrf.mxu0
        %v583 = vpop.f32.mrf.mxu0
        %v584 = vadd.f32 0.0, %v583
        %v585 = vpop.f32.mrf.mxu0
        %586 = vmatprep.mubr.bf16.mxu0 0
        %587 = vmatmul.mubr.bf16.gmra.mxu0 %v544
        %v588 = vpop.f32.mrf.mxu0
        %v589 = vadd.f32 0.0, %v588
        %v590 = vpop.f32.mrf.mxu0
        %v591 = vpop.f32.mrf.mxu0
        %v592 = vadd.f32 0.0, %v591
        %v593 = vpop.f32.mrf.mxu0
        %594 = vdwg.mxu0
        %v595 = vadd.f32 %v504, %v581
        %v596 = vadd.f32 %v507, %v584
        %v597 = vadd.f32 %v512, %v589
        %v598 = vadd.f32 %v515, %v592
        %s599 = scalar_lea.vmem %s2, 48
        %v600 = vld [vmem:[%s599] sm:$0xf]
        %v601 = vld [vmem:[%s599 + $0x4] sm:$0xf]
        %v602 = vld [vmem:[%s599 + $0x8] sm:$0xf]
        %v603 = vld [vmem:[%s599 + $0xc] sm:$0xf]
        %v608 = vunpack.c.l.b16 %v600
        %v609 = vunpack.c.l.b16 %v601
        %v610 = vunpack.c.l.b16 %v602
        %v611 = vunpack.c.l.b16 %v603
        %v612 = vpack.c.b16 %v609, %v608
        %v613 = vpack.c.b16 %v611, %v610
        %614 = vrot.lane.b32.xlu0 %v382, 125
        %v615 = vpop.permute.xlu0 %614
        %616 = vrot.lane.b32.xlu0 %v383, 125
        %v617 = vpop.permute.xlu0 %616
        %vm618 = vcmask 1022976
        %v619 = vsel %vm618, %v615, %v617
        %v622 = vsel %vm391, %v612, 0
        %v625 = vsel %vm391, %v613, 0
        %627 = vmatprep.subr.bf16.mxu0 0
        %628 = vmatpush1.bf16.msra.mxu0 0
        %629 = vmatprep.subr.bf16.mxu0 0
        %630 = vmatpush1.bf16.msra.mxu0 0
        %631 = vmatprep.subr.bf16.mxu0 0
        %632 = vmatpush1.bf16.msra.mxu0 0
        %633 = vmatprep.subr.bf16.mxu0 0
        %634 = vmatpush1.bf16.msra.mxu0 0
        %635 = vmatprep.subr.bf16.mxu0 0
        %636 = vmatpush1.bf16.msra.mxu0 0
        %637 = vmatprep.subr.bf16.mxu0 0
        %638 = vmatpush1.bf16.msra.mxu0 0
        %639 = vmatprep.subr.bf16.mxu0 0
        %640 = vmatpush1.bf16.msra.mxu0 0
        %641 = vmatprep.subr.bf16.mxu0 0
        %642 = vmatpush1.bf16.msra.mxu0 %v619
        %643 = vmatprep.subr.bf16.mxu0 0
        %644 = vmatpush2.bf16.msra.mxu0 0
        %645 = vmatprep.subr.bf16.mxu0 0
        %646 = vmatpush2.bf16.msra.mxu0 0
        %647 = vmatprep.subr.bf16.mxu0 0
        %648 = vmatpush2.bf16.msra.mxu0 0
        %649 = vmatprep.subr.bf16.mxu0 0
        %650 = vmatpush2.bf16.msra.mxu0 0
        %651 = vmatprep.subr.bf16.mxu0 0
        %652 = vmatpush2.bf16.msra.mxu0 0
        %653 = vmatprep.subr.bf16.mxu0 0
        %654 = vmatpush2.bf16.msra.mxu0 0
        %655 = vmatprep.subr.bf16.mxu0 0
        %656 = vmatpush2.bf16.msra.mxu0 0
        %657 = vmatprep.subr.bf16.mxu0 0
        %658 = vmatpush2.bf16.msra.mxu0 0
        %659 = vmatprep.mubr.bf16.mxu0 0
        %660 = vmatmul.mubr.bf16.gmra.mxu0 %v622
        %v661 = vpop.f32.mrf.mxu0
        %v662 = vadd.f32 0.0, %v661
        %v663 = vpop.f32.mrf.mxu0
        %v664 = vpop.f32.mrf.mxu0
        %v665 = vadd.f32 0.0, %v664
        %v666 = vpop.f32.mrf.mxu0
        %667 = vmatprep.mubr.bf16.mxu0 0
        %668 = vmatmul.mubr.bf16.gmra.mxu0 %v625
        %v669 = vpop.f32.mrf.mxu0
        %v670 = vadd.f32 0.0, %v669
        %v671 = vpop.f32.mrf.mxu0
        %v672 = vpop.f32.mrf.mxu0
        %v673 = vadd.f32 0.0, %v672
        %v674 = vpop.f32.mrf.mxu0
        %675 = vdwg.mxu0
        %v676 = vadd.f32 %v595, %v662
        %v677 = vadd.f32 %v596, %v665
        %v678 = vadd.f32 %v597, %v670
        %v679 = vadd.f32 %v598, %v673
        %s680 = scalar_lea.vmem %s2, 64
        %v681 = vld [vmem:[%s680] sm:$0xf]
        %v682 = vld [vmem:[%s680 + $0x4] sm:$0xf]
        %v683 = vld [vmem:[%s680 + $0x8] sm:$0xf]
        %v684 = vld [vmem:[%s680 + $0xc] sm:$0xf]
        %v689 = vunpack.c.l.b16 %v681
        %v690 = vunpack.c.l.b16 %v682
        %v691 = vunpack.c.l.b16 %v683
        %v692 = vunpack.c.l.b16 %v684
        %v693 = vpack.c.b16 %v690, %v689
        %v694 = vpack.c.b16 %v692, %v691
        %695 = vrot.lane.b32.xlu0 %v382, 124
        %v696 = vpop.permute.xlu0 %695
        %697 = vrot.lane.b32.xlu0 %v383, 124
        %v698 = vpop.permute.xlu0 %697
        %vm699 = vcmask 1014784
        %v700 = vsel %vm699, %v696, %v698
        %v703 = vsel %vm391, %v693, 0
        %v706 = vsel %vm391, %v694, 0
        %708 = vmatprep.subr.bf16.mxu0 0
        %709 = vmatpush1.bf16.msra.mxu0 0
        %710 = vmatprep.subr.bf16.mxu0 0
        %711 = vmatpush1.bf16.msra.mxu0 0
        %712 = vmatprep.subr.bf16.mxu0 0
        %713 = vmatpush1.bf16.msra.mxu0 0
        %714 = vmatprep.subr.bf16.mxu0 0
        %715 = vmatpush1.bf16.msra.mxu0 0
        %716 = vmatprep.subr.bf16.mxu0 0
        %717 = vmatpush1.bf16.msra.mxu0 0
        %718 = vmatprep.subr.bf16.mxu0 0
        %719 = vmatpush1.bf16.msra.mxu0 0
        %720 = vmatprep.subr.bf16.mxu0 0
        %721 = vmatpush1.bf16.msra.mxu0 0
        %722 = vmatprep.subr.bf16.mxu0 0
        %723 = vmatpush1.bf16.msra.mxu0 %v700
        %724 = vmatprep.subr.bf16.mxu0 0
        %725 = vmatpush2.bf16.msra.mxu0 0
        %726 = vmatprep.subr.bf16.mxu0 0
        %727 = vmatpush2.bf16.msra.mxu0 0
        %728 = vmatprep.subr.bf16.mxu0 0
        %729 = vmatpush2.bf16.msra.mxu0 0
        %730 = vmatprep.subr.bf16.mxu0 0
        %731 = vmatpush2.bf16.msra.mxu0 0
        %732 = vmatprep.subr.bf16.mxu0 0
        %733 = vmatpush2.bf16.msra.mxu0 0
        %734 = vmatprep.subr.bf16.mxu0 0
        %735 = vmatpush2.bf16.msra.mxu0 0
        %736 = vmatprep.subr.bf16.mxu0 0
        %737 = vmatpush2.bf16.msra.mxu0 0
        %738 = vmatprep.subr.bf16.mxu0 0
        %739 = vmatpush2.bf16.msra.mxu0 0
        %740 = vmatprep.mubr.bf16.mxu0 0
        %741 = vmatmul.mubr.bf16.gmra.mxu0 %v703
        %v742 = vpop.f32.mrf.mxu0
        %v743 = vadd.f32 0.0, %v742
        %v744 = vpop.f32.mrf.mxu0
        %v745 = vpop.f32.mrf.mxu0
        %v746 = vadd.f32 0.0, %v745
        %v747 = vpop.f32.mrf.mxu0
        %748 = vmatprep.mubr.bf16.mxu0 0
        %749 = vmatmul.mubr.bf16.gmra.mxu0 %v706
        %v750 = vpop.f32.mrf.mxu0
        %v751 = vadd.f32 0.0, %v750
        %v752 = vpop.f32.mrf.mxu0
        %v753 = vpop.f32.mrf.mxu0
        %v754 = vadd.f32 0.0, %v753
        %v755 = vpop.f32.mrf.mxu0
        %756 = vdwg.mxu0
        %v757 = vadd.f32 %v676, %v743
        %v758 = vadd.f32 %v677, %v746
        %v759 = vadd.f32 %v678, %v751
        %v760 = vadd.f32 %v679, %v754
        %s761 = scalar_lea.vmem %s2, 80
        %v762 = vld [vmem:[%s761] sm:$0xf]
        %v763 = vld [vmem:[%s761 + $0x4] sm:$0xf]
        %v764 = vld [vmem:[%s761 + $0x8] sm:$0xf]
        %v765 = vld [vmem:[%s761 + $0xc] sm:$0xf]
        %v770 = vunpack.c.l.b16 %v762
        %v771 = vunpack.c.l.b16 %v763
        %v772 = vunpack.c.l.b16 %v764
        %v773 = vunpack.c.l.b16 %v765
        %v774 = vpack.c.b16 %v771, %v770
        %v775 = vpack.c.b16 %v773, %v772
        %776 = vrot.lane.b32.xlu0 %v382, 123
        %v777 = vpop.permute.xlu0 %776
        %778 = vrot.lane.b32.xlu0 %v383, 123
        %v779 = vpop.permute.xlu0 %778
        %vm780 = vcmask 1006592
        %v781 = vsel %vm780, %v777, %v779
        %v784 = vsel %vm391, %v774, 0
        %v787 = vsel %vm391, %v775, 0
        %789 = vmatprep.subr.bf16.mxu0 0
        %790 = vmatpush1.bf16.msra.mxu0 0
        %791 = vmatprep.subr.bf16.mxu0 0
        %792 = vmatpush1.bf16.msra.mxu0 0
        %793 = vmatprep.subr.bf16.mxu0 0
        %794 = vmatpush1.bf16.msra.mxu0 0
        %795 = vmatprep.subr.bf16.mxu0 0
        %796 = vmatpush1.bf16.msra.mxu0 0
        %797 = vmatprep.subr.bf16.mxu0 0
        %798 = vmatpush1.bf16.msra.mxu0 0
        %799 = vmatprep.subr.bf16.mxu0 0
        %800 = vmatpush1.bf16.msra.mxu0 0
        %801 = vmatprep.subr.bf16.mxu0 0
        %802 = vmatpush1.bf16.msra.mxu0 0
        %803 = vmatprep.subr.bf16.mxu0 0
        %804 = vmatpush1.bf16.msra.mxu0 %v781
        %805 = vmatprep.subr.bf16.mxu0 0
        %806 = vmatpush2.bf16.msra.mxu0 0
        %807 = vmatprep.subr.bf16.mxu0 0
        %808 = vmatpush2.bf16.msra.mxu0 0
        %809 = vmatprep.subr.bf16.mxu0 0
        %810 = vmatpush2.bf16.msra.mxu0 0
        %811 = vmatprep.subr.bf16.mxu0 0
        %812 = vmatpush2.bf16.msra.mxu0 0
        %813 = vmatprep.subr.bf16.mxu0 0
        %814 = vmatpush2.bf16.msra.mxu0 0
        %815 = vmatprep.subr.bf16.mxu0 0
        %816 = vmatpush2.bf16.msra.mxu0 0
        %817 = vmatprep.subr.bf16.mxu0 0
        %818 = vmatpush2.bf16.msra.mxu0 0
        %819 = vmatprep.subr.bf16.mxu0 0
        %820 = vmatpush2.bf16.msra.mxu0 0
        %821 = vmatprep.mubr.bf16.mxu0 0
        %822 = vmatmul.mubr.bf16.gmra.mxu0 %v784
        %v823 = vpop.f32.mrf.mxu0
        %v824 = vadd.f32 0.0, %v823
        %v825 = vpop.f32.mrf.mxu0
        %v826 = vpop.f32.mrf.mxu0
        %v827 = vadd.f32 0.0, %v826
        %v828 = vpop.f32.mrf.mxu0
        %829 = vmatprep.mubr.bf16.mxu0 0
        %830 = vmatmul.mubr.bf16.gmra.mxu0 %v787
        %v831 = vpop.f32.mrf.mxu0
        %v832 = vadd.f32 0.0, %v831
        %v833 = vpop.f32.mrf.mxu0
        %v834 = vpop.f32.mrf.mxu0
        %v835 = vadd.f32 0.0, %v834
        %v836 = vpop.f32.mrf.mxu0
        %837 = vdwg.mxu0
        %v838 = vadd.f32 %v757, %v824
        %v839 = vadd.f32 %v758, %v827
        %v840 = vadd.f32 %v759, %v832
        %v841 = vadd.f32 %v760, %v835
        %s842 = scalar_lea.vmem %s2, 96
        %v843 = vld [vmem:[%s842] sm:$0xf]
        %v844 = vld [vmem:[%s842 + $0x4] sm:$0xf]
        %v845 = vld [vmem:[%s842 + $0x8] sm:$0xf]
        %v846 = vld [vmem:[%s842 + $0xc] sm:$0xf]
        %v851 = vunpack.c.l.b16 %v843
        %v852 = vunpack.c.l.b16 %v844
        %v853 = vunpack.c.l.b16 %v845
        %v854 = vunpack.c.l.b16 %v846
        %v855 = vpack.c.b16 %v852, %v851
        %v856 = vpack.c.b16 %v854, %v853
        %857 = vrot.lane.b32.xlu0 %v382, 122
        %v858 = vpop.permute.xlu0 %857
        %859 = vrot.lane.b32.xlu0 %v383, 122
        %v860 = vpop.permute.xlu0 %859
        %vm861 = vcmask 998400
        %v862 = vsel %vm861, %v858, %v860
        %v865 = vsel %vm391, %v855, 0
        %v868 = vsel %vm391, %v856, 0
        %870 = vmatprep.subr.bf16.mxu0 0
        %871 = vmatpush1.bf16.msra.mxu0 0
        %872 = vmatprep.subr.bf16.mxu0 0
        %873 = vmatpush1.bf16.msra.mxu0 0
        %874 = vmatprep.subr.bf16.mxu0 0
        %875 = vmatpush1.bf16.msra.mxu0 0
        %876 = vmatprep.subr.bf16.mxu0 0
        %877 = vmatpush1.bf16.msra.mxu0 0
        %878 = vmatprep.subr.bf16.mxu0 0
        %879 = vmatpush1.bf16.msra.mxu0 0
        %880 = vmatprep.subr.bf16.mxu0 0
        %881 = vmatpush1.bf16.msra.mxu0 0
        %882 = vmatprep.subr.bf16.mxu0 0
        %883 = vmatpush1.bf16.msra.mxu0 0
        %884 = vmatprep.subr.bf16.mxu0 0
        %885 = vmatpush1.bf16.msra.mxu0 %v862
        %886 = vmatprep.subr.bf16.mxu0 0
        %887 = vmatpush2.bf16.msra.mxu0 0
        %888 = vmatprep.subr.bf16.mxu0 0
        %889 = vmatpush2.bf16.msra.mxu0 0
        %890 = vmatprep.subr.bf16.mxu0 0
        %891 = vmatpush2.bf16.msra.mxu0 0
        %892 = vmatprep.subr.bf16.mxu0 0
        %893 = vmatpush2.bf16.msra.mxu0 0
        %894 = vmatprep.subr.bf16.mxu0 0
        %895 = vmatpush2.bf16.msra.mxu0 0
        %896 = vmatprep.subr.bf16.mxu0 0
        %897 = vmatpush2.bf16.msra.mxu0 0
        %898 = vmatprep.subr.bf16.mxu0 0
        %899 = vmatpush2.bf16.msra.mxu0 0
        %900 = vmatprep.subr.bf16.mxu0 0
        %901 = vmatpush2.bf16.msra.mxu0 0
        %902 = vmatprep.mubr.bf16.mxu0 0
        %903 = vmatmul.mubr.bf16.gmra.mxu0 %v865
        %v904 = vpop.f32.mrf.mxu0
        %v905 = vadd.f32 0.0, %v904
        %v906 = vpop.f32.mrf.mxu0
        %v907 = vpop.f32.mrf.mxu0
        %v908 = vadd.f32 0.0, %v907
        %v909 = vpop.f32.mrf.mxu0
        %910 = vmatprep.mubr.bf16.mxu0 0
        %911 = vmatmul.mubr.bf16.gmra.mxu0 %v868
        %v912 = vpop.f32.mrf.mxu0
        %v913 = vadd.f32 0.0, %v912
        %v914 = vpop.f32.mrf.mxu0
        %v915 = vpop.f32.mrf.mxu0
        %v916 = vadd.f32 0.0, %v915
        %v917 = vpop.f32.mrf.mxu0
        %918 = vdwg.mxu0
        %v919 = vadd.f32 %v838, %v905
        %v920 = vadd.f32 %v839, %v908
        %v921 = vadd.f32 %v840, %v913
        %v922 = vadd.f32 %v841, %v916
        %v923 = vld [vmem:[%s3] sm:$0xff]
        %v924 = vld [vmem:[%s3 + $0x8] sm:$0xff]
        %v925 = vld [vmem:[%s3 + $0x10] sm:$0xff]
        %v926 = vld [vmem:[%s3 + $0x18] sm:$0xff]
        %928 = vset.pattern.permute.xlu0 0
        %929 = vperm.xlu0 %928, %v923
        %v930 = vpop.permute.xlu0 %929
        %933 = vset.pattern.permute.xlu0 0
        %934 = vperm.xlu0 %933, %v924
        %v935 = vpop.permute.xlu0 %934
        %938 = vset.pattern.permute.xlu0 0
        %939 = vperm.xlu0 %938, %v925
        %v940 = vpop.permute.xlu0 %939
        %943 = vset.pattern.permute.xlu0 0
        %944 = vperm.xlu0 %943, %v926
        %v945 = vpop.permute.xlu0 %944
        %v947 = vadd.f32 %v919, %v930
        %v948 = vadd.f32 %v920, %v935
        %v949 = vadd.f32 %v921, %v940
        %v950 = vadd.f32 %v922, %v945
        %v951 = vpack.c.bf16 %v948, %v947
        %v952 = vpack.c.bf16 %v950, %v949
        %v955 = vunpack.c.l.b16 %v951
        %v956 = vunpack.c.h.b16 %v951
        %v957 = vunpack.c.l.b16 %v952
        %v958 = vunpack.c.h.b16 %v952
        %v959 = vpack.c.b16 %v955, %v955
        %v960 = vpack.c.b16 %v956, %v956
        %v961 = vpack.c.b16 %v957, %v957
        %v962 = vpack.c.b16 %v958, %v958
        %967 = vst [vmem:[%s343] sm:$0xf] %v959
        %968 = vst [vmem:[%s343 + $0x4] sm:$0xf] %v960
        %969 = vst [vmem:[%s343 + $0x8] sm:$0xf] %v961
        %970 = vst [vmem:[%s343 + $0xc] sm:$0xf] %v962
        %p971 = scmp.lt.s32.totalorder %s19, 1
        %s972 = scalar_select %p971, %s19, 1
        %p973 = scmp.lt.s32.totalorder %s20, 0
        %s974 = scalar_select %p973, %s20, 0
        %s975 = smul.addr %s972, 4
        %s976 = sadd.s32 %s974, %s975
        %s977 = smul.addr %s976, 4
        %s978 = scalar_lea.vmem %s4, %s977
        // Predicated region
        $region119: #{tpu_custom_call.1} parent=109 // pred_check
          %p979 = pneg %p147
        $region120: #{tpu_custom_call.1} parent=109 // pred_check_branch
          %981 = sbr.rel (%p979) target = $region122
        $region121: #{tpu_custom_call.1} parent=109 // pred_region
          _
        $region122: #{tpu_custom_call.1} parent=109 // pred_fallthru
          _
      $region110: #{tpu_custom_call.1} parent=5 // pred_fallthru
        _
      %p982 = scmp.le.s32.totalorder 2, %s10
      // Predicated region
      $region123: #{tpu_custom_call.1} parent=5 // pred_check
        %p983 = pneg %p982
      $region124: #{tpu_custom_call.1} parent=5 // pred_check_branch
        %985 = sbr.rel (%p983) target = $region126
      $region125: #{tpu_custom_call.1} parent=5 // pred_region
        %s986 = ssub.s32 %s10, 2
        // Predicated region
        $region127: #{tpu_custom_call.1} parent=125 // pred_check
          %p987 = pneg %p153
        $region128: #{tpu_custom_call.1} parent=125 // pred_check_branch
          %989 = sbr.rel (%p987) target = $region130
        $region129: #{tpu_custom_call.1} parent=125 // pred_region
          %p990 = scmp.lt.s32.totalorder %s21, 1
          %s991 = scalar_select %p990, %s21, 1
          %p992 = scmp.lt.s32.totalorder %s22, 0
          %s993 = scalar_select %p992, %s22, 0
          %s994 = smul.addr %s991, 4
          %s995 = sadd.s32 %s993, %s994
          %s996 = smul.addr %s995, 4
          %s997 = scalar_lea.vmem %s4, %s996
        $region130: #{tpu_custom_call.1} parent=125 // pred_fallthru
          _
      $region126: #{tpu_custom_call.1} parent=5 // pred_fallthru
        _
    $region6: #{tpu_custom_call.1} parent=1 // loop_footer
      %s14 = sadd.s32 1, %s10
    $region7: #{tpu_custom_call.1} parent=1 // loop_footer_branch
      %9 = sbr.rel target = $region3
    $region8: #{tpu_custom_call.1} parent=1 // loop_exit
      _

</llo_original>
